<compile_context>
chip_gen: v7x
topology: tpu7x:2x2x1
jax: 0.10.0
libtpu: 0.0.40
codegen_flags: <defaults>
</compile_context>

<pallas_src>
import functools

import jax
import jax.numpy as jnp
from jax.experimental import pallas as pl
from jax.experimental.pallas import tpu as pltpu

LANE = 128     # TPU lane width: pad feature dims to this for dense vregs/stores.
SUBLANE = 8    # sublane granularity for row offsets inside the packed slab.


def _round_up(x, m):
    return ((x + m - 1) // m) * m


def mlp_kernel(x_ref, slab_ref, o_ref, *, e, e_pad, w):
    """Fused Linear -> ReLU -> BatchNorm1d -> (Dropout id) -> Linear -> ReLU.

    slab_ref is one packed f32 [e_pad + w + 8, w] VMEM slab:
      rows [0, e)              : w1   (E x W, hidden dim zero-padded to W)
      rows [e_pad, e_pad + w)  : w2'  (W x W, gamma folded in, zero-padded)
      row  e_pad + w           : b1   (zero-padded to W)
      row  e_pad + w + 1       : b2'  (= b2 + beta @ w2, zero-padded to W)
    """
    n = x_ref.shape[0]
    inv_n = 1.0 / n  # compile-time constant; no divides in the kernel body

    x = x_ref[...]                                         # [N, E]
    w1 = slab_ref[0:e, :]                                  # [E, W]
    w2p = slab_ref[e_pad:e_pad + w, :]                     # [W, W]
    params = slab_ref[e_pad + w:e_pad + w + SUBLANE, :]    # [8, W] (aligned load)
    b1 = params[0:1, :]                                    # [1, W]
    b2p = params[1:2, :]                                   # [1, W]

    # ---- Linear(E -> W) + ReLU (MXU + VPU); padded hidden columns stay 0 ----
    h = jnp.maximum(jnp.dot(x, w1, preferred_element_type=jnp.float32) + b1, 0.0)

    # ---- BatchNorm1d: training-mode batch stats, one-pass variance.
    #      gamma/beta are folded into w2'/b2' outside the kernel, so only the
    #      normalization happens here.  The two axis-0 reductions are
    #      independent -> shorter XLU critical path than the two-pass form.
    sum_h = jnp.sum(h, axis=0, keepdims=True)              # [1, W]
    sum_h2 = jnp.sum(h * h, axis=0, keepdims=True)         # [1, W]
    mean = sum_h * inv_n
    var = sum_h2 * inv_n - mean * mean                     # biased variance
    h_norm = (h - mean) * jax.lax.rsqrt(var + 1e-5)        # [N, W]

    # ---- Dropout(p=0.2): identity ----
    # TODO(synk): stochastic dropout not applied; identity (eval semantics).

    # ---- Linear(W -> W) + ReLU; BN affine already folded into w2'/b2' ----
    out = jnp.dot(h_norm, w2p, preferred_element_type=jnp.float32) + b2p
    o_ref[...] = jnp.maximum(out, 0.0).astype(o_ref.dtype)


def prepare_mlp_params(w1, b1, gamma, beta, w2, b2):
    """One-time fold + pack of all static parameters into a single VMEM slab.

    Run once at init (outside the per-step hot path).  The per-call path then
    issues exactly two input DMAs: x and this slab.
    """
    E, H = w1.shape
    C = w2.shape[1]
    W = max(_round_up(H, LANE), _round_up(C, LANE))   # lane-dense work width
    e_pad = _round_up(E, SUBLANE)

    # Fold BatchNorm affine into the second linear:
    #   (z*gamma + beta) @ w2 + b2 == z @ (gamma^T * w2) + (beta @ w2 + b2)
    w2p = gamma.reshape(H, 1) * w2                                  # [H, C]
    b2p = b2.reshape(1, C) + beta.reshape(1, H) @ w2                # [1, C]

    # Zero-pad everything to the lane-dense work width W.  Numerically inert:
    # padded hidden columns are 0 through ReLU/BN, padded w2' rows/cols are 0.
    w1_p = jnp.pad(w1.astype(jnp.float32), ((0, e_pad - E), (0, W - H)))
    w2p_p = jnp.pad(w2p.astype(jnp.float32), ((0, W - H), (0, W - C)))
    b1_row = jnp.pad(b1.reshape(1, H).astype(jnp.float32), ((0, 0), (0, W - H)))
    b2_row = jnp.pad(b2p.astype(jnp.float32), ((0, 0), (0, W - C)))
    tail = jnp.zeros((SUBLANE - 2, W), jnp.float32)

    slab = jnp.concatenate([w1_p, w2p_p, b1_row, b2_row, tail], axis=0)
    slab = jax.block_until_ready(slab)   # materialize once, outside the hot path

    meta = dict(e=E, e_pad=e_pad, w=W, c=C)
    return slab, meta


def mlp_forward(x, slab, meta):
    """Runs the fused kernel.

    Returns the lane-dense padded output [N, W]; the consumer slices [:, :C]
    (or fuses the slice into the next op) so no standalone slice dispatch is
    added here.
    """
    n = x.shape[0]
    kernel = functools.partial(
        mlp_kernel, e=meta["e"], e_pad=meta["e_pad"], w=meta["w"])
    return pl.pallas_call(
        kernel,
        out_shape=jax.ShapeDtypeStruct((n, meta["w"]), jnp.float32),
        in_specs=[pl.BlockSpec(memory_space=pltpu.MemorySpace.VMEM)] * 2,
        out_specs=pl.BlockSpec(memory_space=pltpu.MemorySpace.VMEM),
    )(x, slab)


def mlp_reference(x, w1, b1, gamma, beta, w2, b2):
    """Pure-JAX reference with identical semantics (sanity check)."""
    h = jnp.maximum(x @ w1 + b1, 0.0)
    mean = jnp.mean(h, axis=0, keepdims=True)
    var = jnp.mean((h - mean) ** 2, axis=0, keepdims=True)
    hn = (h - mean) / jnp.sqrt(var + 1e-5) * gamma + beta
    return jnp.maximum(hn @ w2 + b2, 0.0)


if __name__ == "__main__":
    # Module hyperparameters (small, consistent with the forward pass):
    num_of_embedding = 32
    hidden_channels = 64
    num_of_cell_type = 16
    batch = 8

    key = jax.random.PRNGKey(0)
    kx, k1, kb1, k2, kb2, kg, kb = jax.random.split(key, 7)

    # Deterministic synthetic parameters (shapes from nn.Linear / nn.BatchNorm1d).
    x = jax.random.normal(kx, (batch, num_of_embedding), dtype=jnp.float32)
    w1 = jax.random.normal(k1, (num_of_embedding, hidden_channels), jnp.float32) * 0.1
    b1 = jax.random.normal(kb1, (1, hidden_channels), jnp.float32) * 0.1
    gamma = 1.0 + 0.1 * jax.random.normal(kg, (1, hidden_channels), jnp.float32)
    beta = 0.1 * jax.random.normal(kb, (1, hidden_channels), jnp.float32)
    w2 = jax.random.normal(k2, (hidden_channels, num_of_cell_type), jnp.float32) * 0.1
    b2 = jax.random.normal(kb2, (1, num_of_cell_type), jnp.float32) * 0.1

    # One-time parameter fold + pack (outside the per-call hot path).
    slab, meta = prepare_mlp_params(w1, b1, gamma, beta, w2, b2)

    out_padded = mlp_forward(x, slab, meta)
    out_padded = jax.block_until_ready(out_padded)
    out = out_padded[:, :meta["c"]]   # consumer-side slice of the padded output

    ref = mlp_reference(x, w1, b1, gamma, beta, w2, b2)
    assert out.shape == (batch, num_of_cell_type)
    err = float(jnp.max(jnp.abs(out - ref)))
    assert jnp.allclose(out, ref, atol=1e-4, rtol=1e-4), err

    print("KERNEL_OK")
</pallas_src>

<mosaic_0001>
module attributes {stable_mosaic.version = 11 : i64} {
  func.func @mlp_kernel(%arg0: memref<8x32xf32, #tpu.memory_space<vmem>>, %arg1: memref<168x128xf32, #tpu.memory_space<vmem>>, %arg2: memref<8x128xf32, #tpu.memory_space<vmem>>) attributes {dimension_semantics = [], scalar_prefetch = 0 : i64, scratch_operands = 0 : i64, tpu.core_type = #tpu.core_type<tc>} {
    %c0 = arith.constant 0 : index
    %c0_0 = arith.constant 0 : index
    %0 = vector.load %arg0[%c0, %c0_0] : memref<8x32xf32, #tpu.memory_space<vmem>>, vector<8x32xf32>
    %c0_1 = arith.constant 0 : index
    %c0_2 = arith.constant 0 : index
    %1 = vector.load %arg1[%c0_1, %c0_2] : memref<168x128xf32, #tpu.memory_space<vmem>>, vector<32x128xf32>
    %c32 = arith.constant 32 : index
    %c0_3 = arith.constant 0 : index
    %2 = vector.load %arg1[%c32, %c0_3] : memref<168x128xf32, #tpu.memory_space<vmem>>, vector<128x128xf32>
    %c160 = arith.constant 160 : index
    %c0_4 = arith.constant 0 : index
    %3 = vector.load %arg1[%c160, %c0_4] : memref<168x128xf32, #tpu.memory_space<vmem>>, vector<8x128xf32>
    %4 = vector.extract_strided_slice %3 {offsets = [0, 0], sizes = [1, 128], strides = [1, 1]} : vector<8x128xf32> to vector<1x128xf32>
    %5 = vector.extract_strided_slice %3 {offsets = [1, 0], sizes = [1, 128], strides = [1, 1]} : vector<8x128xf32> to vector<1x128xf32>
    %cst = arith.constant dense<0.000000e+00> : vector<8x128xf32>
    %6 = tpu.matmul %0, %1, %cst {dimension_numbers = #tpu.dot_dimension_numbers<[1], [0], [0], [1], [0, 0, 1, 1], [], []>} : vector<8x32xf32>, vector<32x128xf32>, vector<8x128xf32> -> vector<8x128xf32>
    %7 = vector.broadcast %4 : vector<1x128xf32> to vector<8x128xf32>
    %8 = arith.addf %6, %7 : vector<8x128xf32>
    %cst_5 = arith.constant 0.000000e+00 : f32
    %9 = vector.broadcast %cst_5 : f32 to vector<8x128xf32>
    %10 = arith.maximumf %8, %9 : vector<8x128xf32>
    %cst_6 = arith.constant dense<0.000000e+00> : vector<128xf32>
    %11 = vector.multi_reduction <add>, %10, %cst_6 [0] : vector<8x128xf32> to vector<128xf32>
    %12 = vector.shape_cast %11 : vector<128xf32> to vector<1x128xf32>
    %13 = arith.mulf %10, %10 : vector<8x128xf32>
    %cst_7 = arith.constant dense<0.000000e+00> : vector<128xf32>
    %14 = vector.multi_reduction <add>, %13, %cst_7 [0] : vector<8x128xf32> to vector<128xf32>
    %15 = vector.shape_cast %14 : vector<128xf32> to vector<1x128xf32>
    %cst_8 = arith.constant 1.250000e-01 : f32
    %16 = vector.broadcast %cst_8 : f32 to vector<1x128xf32>
    %17 = arith.mulf %12, %16 : vector<1x128xf32>
    %cst_9 = arith.constant 1.250000e-01 : f32
    %18 = vector.broadcast %cst_9 : f32 to vector<1x128xf32>
    %19 = arith.mulf %15, %18 : vector<1x128xf32>
    %20 = arith.mulf %17, %17 : vector<1x128xf32>
    %21 = arith.subf %19, %20 : vector<1x128xf32>
    %22 = vector.broadcast %17 : vector<1x128xf32> to vector<8x128xf32>
    %23 = arith.subf %10, %22 : vector<8x128xf32>
    %cst_10 = arith.constant 9.99999974E-6 : f32
    %24 = vector.broadcast %cst_10 : f32 to vector<1x128xf32>
    %25 = arith.addf %21, %24 : vector<1x128xf32>
    %26 = math.rsqrt %25 : vector<1x128xf32>
    %27 = vector.broadcast %26 : vector<1x128xf32> to vector<8x128xf32>
    %28 = arith.mulf %23, %27 : vector<8x128xf32>
    %cst_11 = arith.constant dense<0.000000e+00> : vector<8x128xf32>
    %29 = tpu.matmul %28, %2, %cst_11 {dimension_numbers = #tpu.dot_dimension_numbers<[1], [0], [0], [1], [0, 0, 1, 1], [], []>} : vector<8x128xf32>, vector<128x128xf32>, vector<8x128xf32> -> vector<8x128xf32>
    %30 = vector.broadcast %5 : vector<1x128xf32> to vector<8x128xf32>
    %31 = arith.addf %29, %30 : vector<8x128xf32>
    %cst_12 = arith.constant 0.000000e+00 : f32
    %32 = vector.broadcast %cst_12 : f32 to vector<8x128xf32>
    %33 = arith.maximumf %31, %32 : vector<8x128xf32>
    %c0_13 = arith.constant 0 : index
    %c0_14 = arith.constant 0 : index
    %34 = vector.load %arg2[%c0_13, %c0_14] : memref<8x128xf32, #tpu.memory_space<vmem>>, vector<8x128xf32>
    tpu.vector_store %arg2[%c0_13, %c0_14], %33 {strides = array<i32>} : memref<8x128xf32, #tpu.memory_space<vmem>>, vector<8x128xf32>,
    return
  }
}

</mosaic_0001>

<llo_original>
// kernel: tpu_custom_call.1
$region0: #{tpu_custom_call.1}
  #allocation0 [shape = 'u32[]', space=smem, size = 0x4, offset = 0x4, fixed_abs, tag = 'smem constant byte address 0x4 - core index']
  #allocation1 [shape = 'u32[144,128]{1,0:T(1,128)}', space=vmem, size = 0x12000, scoped, tag = 'internal scratch']
  %s0 = inlined_call_operand.hbm [shape: f32[8,32], index: 0, kind: input, shape index: {}]
  %s1 = inlined_call_operand.hbm [shape: f32[168,128], index: 1, kind: input, shape index: {}]
  %s2 = inlined_call_operand.hbm [shape: f32[8,128], index: 2, kind: output, shape index: {}]
  %s3 = sld [smem:[#allocation0]]
  $region26: #{tpu_custom_call.1} parent=0
    _
  %s5 = ssub.s32 1, %s3
  %s6 = scalar_select 0, %s5, %s3
  $region1: #{tpu_custom_call.1} parent=0
    #allocation2 [shape = 'u8[4096]{0}', space=vmem, size = 0x1000, scoped, tag = 'input window, operand 0, single buffered']
    #allocation3 [shape = 's32[1]{0}', space=sflag, size = 0x4, scoped, tag = 'scoped memory for tpu_custom_call.1']
    #allocation4 [shape = 's32[1]{0}', space=sflag, size = 0x4, scoped, tag = 'scoped memory for tpu_custom_call.1']
    #allocation5 [shape = 'u8[86016]{0}', space=vmem, size = 0x15000, scoped, tag = 'input window, operand 1, single buffered']
    #allocation6 [shape = 's32[1]{0}', space=sflag, size = 0x4, scoped, tag = 'scoped memory for tpu_custom_call.1']
    #allocation7 [shape = 'u8[4096]{0}', space=vmem, size = 0x1000, scoped, tag = 'output window, operand 0, single buffered']
    %7 = vsyncpa [#allocation3], 0
    %8 = vsyncpa [#allocation6], 0
    %9 = vsyncpa [#allocation4], 0
    // Predicated region
    $region2: #{tpu_custom_call.1} parent=1 // pred_check
      _
    $region3: #{tpu_custom_call.1} parent=1 // pred_check_branch
      %11 = sbr.rel (0) target = $region5
    $region4: #{tpu_custom_call.1} parent=1 // pred_region
      %s13 = ssub.s32 128, 128
      %14 = vsyncadd [#allocation3], %s13
      %s16 = sshll.u32 [#allocation2], 4
      %s17 = int_to_ptr.vmem [resolvable:$true] %s16
      %19 = dma.hbm_to_vmem [thread:$0]  %s0, 128, %s17, [#allocation3]
    $region5: #{tpu_custom_call.1} parent=1 // pred_fallthru
      _
    // Predicated region
    $region6: #{tpu_custom_call.1} parent=1 // pred_check
      _
    $region7: #{tpu_custom_call.1} parent=1 // pred_check_branch
      %21 = sbr.rel (0) target = $region9
    $region8: #{tpu_custom_call.1} parent=1 // pred_region
      %s23 = ssub.s32 2688, 2688
      %24 = vsyncadd [#allocation6], %s23
      %s25 = sshll.u32 [#allocation5], 4
      %s26 = int_to_ptr.vmem [resolvable:$true] %s25
      %31 = dma.hbm_to_vmem [thread:$0]  %s1, 2688, %s26, [#allocation6], 128, 128, 8
    $region9: #{tpu_custom_call.1} parent=1 // pred_fallthru
      _
    // Predicated region
    $region10: #{tpu_custom_call.1} parent=1 // pred_check
      _
    $region11: #{tpu_custom_call.1} parent=1 // pred_check_branch
      %33 = sbr.rel (0) target = $region13
    $region12: #{tpu_custom_call.1} parent=1 // pred_region
      %34 = dma.done [#allocation3], 128
    $region13: #{tpu_custom_call.1} parent=1 // pred_fallthru
      _
    // Predicated region
    $region14: #{tpu_custom_call.1} parent=1 // pred_check
      _
    $region15: #{tpu_custom_call.1} parent=1 // pred_check_branch
      %36 = sbr.rel (0) target = $region17
    $region16: #{tpu_custom_call.1} parent=1 // pred_region
      %37 = dma.done [#allocation6], 2688
    $region17: #{tpu_custom_call.1} parent=1 // pred_fallthru
      _
    %v38 = vld [vmem:[#allocation2] sm:$0xff]
    %v39 = vld [vmem:[#allocation5] sm:$0xff]
    %v40 = vld [vmem:[#allocation5 + $0x8] sm:$0xff]
    %v41 = vld [vmem:[#allocation5 + $0x10] sm:$0xff]
    %v42 = vld [vmem:[#allocation5 + $0x18] sm:$0xff]
    %v43 = vld [vmem:[#allocation5 + $0x20] sm:$0xff]
    %v44 = vld [vmem:[#allocation5 + $0x28] sm:$0xff]
    %v45 = vld [vmem:[#allocation5 + $0x30] sm:$0xff]
    %v46 = vld [vmem:[#allocation5 + $0x38] sm:$0xff]
    %v47 = vld [vmem:[#allocation5 + $0x40] sm:$0xff]
    %v48 = vld [vmem:[#allocation5 + $0x48] sm:$0xff]
    %v49 = vld [vmem:[#allocation5 + $0x50] sm:$0xff]
    %v50 = vld [vmem:[#allocation5 + $0x58] sm:$0xff]
    %v51 = vld [vmem:[#allocation5 + $0x60] sm:$0xff]
    %v52 = vld [vmem:[#allocation5 + $0x68] sm:$0xff]
    %v53 = vld [vmem:[#allocation5 + $0x70] sm:$0xff]
    %v54 = vld [vmem:[#allocation5 + $0x78] sm:$0xff]
    %v55 = vld [vmem:[#allocation5 + $0x80] sm:$0xff]
    %v56 = vld [vmem:[#allocation5 + $0x88] sm:$0xff]
    %v57 = vld [vmem:[#allocation5 + $0x90] sm:$0xff]
    %v58 = vld [vmem:[#allocation5 + $0x98] sm:$0xff]
    %v59 = vld [vmem:[#allocation5 + $0xa0] sm:$0xff]
    %v60 = vlaneseq
    %v61 = vshrl.u32 %v60, 7
    %v62 = vsub.s32 0, %v61
    %v63 = vrot.slane %v59, %v62
    %vm64 = vcmask 261120
    %v66 = vsel %vm64, %v38, 0
    %68 = vmatprep.subr.mxu0 0.0
    %69 = vmatpush1.msra.mxu0 %v39
    %70 = vmatprep.subr.mxu0 0.0
    %71 = vmatpush1.msra.mxu0 %v40
    %72 = vmatprep.subr.mxu0 0.0
    %73 = vmatpush1.msra.mxu0 %v41
    %74 = vmatprep.subr.mxu0 0.0
    %75 = vmatpush1.msra.mxu0 %v42
    %76 = vmatprep.subr.mxu0 0.0
    %77 = vmatpush1.msra.mxu0 0.0
    %78 = vmatprep.subr.mxu0 0.0
    %79 = vmatpush1.msra.mxu0 0.0
    %80 = vmatprep.subr.mxu0 0.0
    %81 = vmatpush1.msra.mxu0 0.0
    %82 = vmatprep.subr.mxu0 0.0
    %83 = vmatpush1.msra.mxu0 0.0
    %84 = vmatprep.subr.mxu0 0.0
    %85 = vmatpush1.msra.mxu0 0.0
    %86 = vmatprep.subr.mxu0 0.0
    %87 = vmatpush1.msra.mxu0 0.0
    %88 = vmatprep.subr.mxu0 0.0
    %89 = vmatpush1.msra.mxu0 0.0
    %90 = vmatprep.subr.mxu0 0.0
    %91 = vmatpush1.msra.mxu0 0.0
    %92 = vmatprep.subr.mxu0 0.0
    %93 = vmatpush1.msra.mxu0 0.0
    %94 = vmatprep.subr.mxu0 0.0
    %95 = vmatpush1.msra.mxu0 0.0
    %96 = vmatprep.subr.mxu0 0.0
    %97 = vmatpush1.msra.mxu0 0.0
    %98 = vmatprep.subr.mxu0 0.0
    %99 = vmatpush1.msra.mxu0 0.0
    %100 = vmatprep.subr.mxu0 0.0
    %101 = vmatpush1.msra.mxu0 0.0
    %102 = vmatprep.subr.mxu0 0.0
    %103 = vmatpush1.msra.mxu0 0.0
    %104 = vmatprep.subr.mxu0 0.0
    %105 = vmatpush1.msra.mxu0 0.0
    %106 = vmatprep.subr.mxu0 0.0
    %107 = vmatpush1.msra.mxu0 0.0
    %108 = vmatprep.subr.mxu0 0.0
    %109 = vmatpush1.msra.mxu0 0.0
    %110 = vmatprep.subr.mxu0 0.0
    %111 = vmatpush1.msra.mxu0 0.0
    %112 = vmatprep.subr.mxu0 0.0
    %113 = vmatpush1.msra.mxu0 0.0
    %114 = vmatprep.subr.mxu0 0.0
    %115 = vmatpush1.msra.mxu0 0.0
    %116 = vmatprep.subr.mxu0 0.0
    %117 = vmatpush1.msra.mxu0 0.0
    %118 = vmatprep.subr.mxu0 0.0
    %119 = vmatpush1.msra.mxu0 0.0
    %120 = vmatprep.subr.mxu0 0.0
    %121 = vmatpush1.msra.mxu0 0.0
    %122 = vmatprep.subr.mxu0 0.0
    %123 = vmatpush1.msra.mxu0 0.0
    %124 = vmatprep.subr.mxu0 0.0
    %125 = vmatpush1.msra.mxu0 0.0
    %126 = vmatprep.subr.mxu0 0.0
    %127 = vmatpush1.msra.mxu0 0.0
    %128 = vmatprep.subr.mxu0 0.0
    %129 = vmatpush1.msra.mxu0 0.0
    %130 = vmatprep.subr.mxu0 0.0
    %131 = vmatpush1.msra.mxu0 0.0
    %132 = vmatprep.mubr.f32.mxu0 0.0
    %133 = vmatmul.mubr.f32.gmra.mrb[0].mxu0 %v66
    %v134 = vpop.f32.mrb[0].mxu0
    %v135 = vadd.f32 %v63, %v134
    %v136 = vpop.f32.mrb[0].mxu0
    %137 = vdwg.mxu0
    %v138 = vmax.f32 %v135, 0.0
    %v139 = vrot.slane %v138, 4
    %v140 = vadd.f32 %v138, %v139
    %v141 = vrot.slane %v140, 2
    %v142 = vadd.f32 %v140, %v141
    %v143 = vrot.slane %v142, 1
    %v144 = vadd.f32 %v142, %v143
    %v145 = vmul.f32 %v138, %v138
    %v146 = vrot.slane %v145, 4
    %v147 = vadd.f32 %v145, %v146
    %v148 = vrot.slane %v147, 2
    %v149 = vadd.f32 %v147, %v148
    %v150 = vrot.slane %v149, 1
    %v151 = vadd.f32 %v149, %v150
    %v152 = vmul.f32 %v144, 0.125
    %v153 = vmul.f32 %v151, 0.125
    %v154 = vmul.f32 %v152, %v152
    %v155 = vsub.f32 %v153, %v154
    %v156 = vsub.f32 %v138, %v152
    %v157 = vadd.f32 %v155, 1e-05
    %v158 = vrsqrt.pop %v157
    %v159 = vmul.f32 %v156, %v158
    %v160 = vlaneseq
    %v161 = vshrl.u32 %v160, 7
    %v162 = vsub.s32 1, %v161
    %v163 = vrot.slane %v59, %v162
    %164 = vmatprep.subr.mxu0 0.0
    %165 = vmatpush1.msra.mxu0 %v43
    %166 = vmatprep.subr.mxu0 0.0
    %167 = vmatpush1.msra.mxu0 %v44
    %168 = vmatprep.subr.mxu0 0.0
    %169 = vmatpush1.msra.mxu0 %v45
    %170 = vmatprep.subr.mxu0 0.0
    %171 = vmatpush1.msra.mxu0 %v46
    %172 = vmatprep.subr.mxu0 0.0
    %173 = vmatpush1.msra.mxu0 %v47
    %174 = vmatprep.subr.mxu0 0.0
    %175 = vmatpush1.msra.mxu0 %v48
    %176 = vmatprep.subr.mxu0 0.0
    %177 = vmatpush1.msra.mxu0 %v49
    %178 = vmatprep.subr.mxu0 0.0
    %179 = vmatpush1.msra.mxu0 %v50
    %180 = vmatprep.subr.mxu0 0.0
    %181 = vmatpush1.msra.mxu0 %v51
    %182 = vmatprep.subr.mxu0 0.0
    %183 = vmatpush1.msra.mxu0 %v52
    %184 = vmatprep.subr.mxu0 0.0
    %185 = vmatpush1.msra.mxu0 %v53
    %186 = vmatprep.subr.mxu0 0.0
    %187 = vmatpush1.msra.mxu0 %v54
    %188 = vmatprep.subr.mxu0 0.0
    %189 = vmatpush1.msra.mxu0 %v55
    %190 = vmatprep.subr.mxu0 0.0
    %191 = vmatpush1.msra.mxu0 %v56
    %192 = vmatprep.subr.mxu0 0.0
    %193 = vmatpush1.msra.mxu0 %v57
    %194 = vmatprep.subr.mxu0 0.0
    %195 = vmatpush1.msra.mxu0 %v58
    %196 = vmatprep.subr.mxu0 0.0
    %197 = vmatpush1.msra.mxu0 0.0
    %198 = vmatprep.subr.mxu0 0.0
    %199 = vmatpush1.msra.mxu0 0.0
    %200 = vmatprep.subr.mxu0 0.0
    %201 = vmatpush1.msra.mxu0 0.0
    %202 = vmatprep.subr.mxu0 0.0
    %203 = vmatpush1.msra.mxu0 0.0
    %204 = vmatprep.subr.mxu0 0.0
    %205 = vmatpush1.msra.mxu0 0.0
    %206 = vmatprep.subr.mxu0 0.0
    %207 = vmatpush1.msra.mxu0 0.0
    %208 = vmatprep.subr.mxu0 0.0
    %209 = vmatpush1.msra.mxu0 0.0
    %210 = vmatprep.subr.mxu0 0.0
    %211 = vmatpush1.msra.mxu0 0.0
    %212 = vmatprep.subr.mxu0 0.0
    %213 = vmatpush1.msra.mxu0 0.0
    %214 = vmatprep.subr.mxu0 0.0
    %215 = vmatpush1.msra.mxu0 0.0
    %216 = vmatprep.subr.mxu0 0.0
    %217 = vmatpush1.msra.mxu0 0.0
    %218 = vmatprep.subr.mxu0 0.0
    %219 = vmatpush1.msra.mxu0 0.0
    %220 = vmatprep.subr.mxu0 0.0
    %221 = vmatpush1.msra.mxu0 0.0
    %222 = vmatprep.subr.mxu0 0.0
    %223 = vmatpush1.msra.mxu0 0.0
    %224 = vmatprep.subr.mxu0 0.0
    %225 = vmatpush1.msra.mxu0 0.0
    %226 = vmatprep.subr.mxu0 0.0
    %227 = vmatpush1.msra.mxu0 0.0
    %228 = vmatprep.mubr.f32.mxu0 0.0
    %229 = vmatmul.mubr.f32.gmra.mrb[0].mxu0 %v159
    %v230 = vpop.f32.mrb[0].mxu0
    %v231 = vadd.f32 %v163, %v230
    %v232 = vpop.f32.mrb[0].mxu0
    %233 = vdwg.mxu0
    %v234 = vmax.f32 %v231, 0.0
    %235 = vst [vmem:[#allocation7] sm:$0xff] %v234
    // Predicated region
    $region18: #{tpu_custom_call.1} parent=1 // pred_check
      _
    $region19: #{tpu_custom_call.1} parent=1 // pred_check_branch
      %237 = sbr.rel (0) target = $region21
    $region20: #{tpu_custom_call.1} parent=1 // pred_region
      %s239 = ssub.s32 128, 128
      %240 = vsyncadd [#allocation4], %s239
      %s242 = sshll.u32 [#allocation7], 4
      %s243 = int_to_ptr.vmem [resolvable:$true] %s242
      %245 = dma.vmem_to_hbm [thread:$0]  %s243, 128, %s2, [#allocation4]
    $region21: #{tpu_custom_call.1} parent=1 // pred_fallthru
      _
    // Predicated region
    $region22: #{tpu_custom_call.1} parent=1 // pred_check
      _
    $region23: #{tpu_custom_call.1} parent=1 // pred_check_branch
      %247 = sbr.rel (0) target = $region25
    $region24: #{tpu_custom_call.1} parent=1 // pred_region
      %248 = dma.done [#allocation4], 128
    $region25: #{tpu_custom_call.1} parent=1 // pred_fallthru
      _
    %249 = vsyncpa [#allocation3], 1
    %250 = vsyncpa [#allocation6], 1
    %251 = vsyncpa [#allocation4], 1

</llo_original>
